<compile_context>
chip_gen: v7x
topology: tpu7x:2x2x1
jax: 0.10.0
libtpu: 0.0.40
codegen_flags: <defaults>
</compile_context>

<pallas_src>
import functools

import jax
import jax.numpy as jnp
from jax.experimental import pallas as pl
from jax.experimental.pallas import tpu as pltpu


def _round_up(x, m):
    return ((x + m - 1) // m) * m


def _pick_tm(M, tm_max):
    # 16-row alignment (bf16 packs 16 rows per sublane group). Single grid step
    # for small M; otherwise at least 2 steps (v7x megacore) and large tiles
    # (amortize per-step overhead on v5e/v6e), capped at tm_max.
    if M <= 256:
        return _round_up(M, 16)
    return min(tm_max, max(256, _round_up(pl.cdiv(M, 2), 16)))


def _mlp_kernel(x_ref, w1_ref, b1_ref, w2_ref, b2_ref, w3_ref, b3_ref, o_ref):
    # bf16 MXU operands with f32 accumulation; bias add + ReLU in f32 on the VPU.
    x = x_ref[...].astype(jnp.bfloat16)          # in-kernel cast (free vs HBM pass)
    h1 = jnp.dot(x, w1_ref[...], preferred_element_type=jnp.float32) + b1_ref[...]
    h1 = jnp.maximum(h1, 0.0).astype(jnp.bfloat16)
    h2 = jnp.dot(h1, w2_ref[...], preferred_element_type=jnp.float32) + b2_ref[...]
    h2 = jnp.maximum(h2, 0.0).astype(jnp.bfloat16)
    out = jnp.dot(h2, w3_ref[...], preferred_element_type=jnp.float32) + b3_ref[...]
    o_ref[...] = out.astype(o_ref.dtype)         # unpadded (tm, out_dim) store


@functools.partial(jax.jit, static_argnames=("tm_max",))
def out_head_forward(x, params, tm_max=2048):
    """x: [T, B, in_dim] float32; params from prepare_out_head_params.
    Returns [T, B, 1, out_dim] (matches the torch forward)."""
    w1, b1, w2, b2, w3, b3 = params              # weights bf16, biases f32
    T, B, in_dim = x.shape
    out_dim = w3.shape[1]
    M = T * B

    x2d = x.reshape(M, in_dim)                   # no pad, no cast in the wrapper
    tm = _pick_tm(M, tm_max)
    grid = (pl.cdiv(M, tm),)                     # edge block masked by Pallas

    # Constant block indices -> weights/biases DMA'd once, stay VMEM-resident.
    full = lambda a: pl.BlockSpec(a.shape, lambda i: (0, 0))

    y2d = pl.pallas_call(
        _mlp_kernel,
        out_shape=jax.ShapeDtypeStruct((M, out_dim), x.dtype),
        grid_spec=pltpu.PrefetchScalarGridSpec(
            num_scalar_prefetch=0,
            grid=grid,
            in_specs=[
                pl.BlockSpec((tm, in_dim), lambda i: (i, 0)),
                full(w1), full(b1),
                full(w2), full(b2),
                full(w3), full(b3),
            ],
            # out_dim (11) == full array dim -> legal block; masked vst on the
            # narrow lane range beats 12x write amplification + a slice kernel.
            out_specs=pl.BlockSpec((tm, out_dim), lambda i: (i, 0)),
        ),
        compiler_params=pltpu.CompilerParams(
            dimension_semantics=("parallel",),
            vmem_limit_bytes=64 * 1024 * 1024,
        ),
    )(x2d, w1, b1, w2, b2, w3, b3)

    return y2d.reshape(T, B, 1, out_dim)


def init_out_head_params(key, in_dim, hid_dims=(512, 128), out_dim=11,
                         dtype=jnp.float32):
    """Deterministic init mimicking nn.Linear (uniform +-1/sqrt(fan_in)).
    Weights stored as [in, out] (transposed vs. torch's [out, in])."""
    dims = [in_dim] + list(hid_dims) + [out_dim]
    params = []
    for i in range(1, len(dims)):
        key, kw, kb = jax.random.split(key, 3)
        fan_in = dims[i - 1]
        bound = 1.0 / (fan_in ** 0.5)
        w = jax.random.uniform(kw, (dims[i - 1], dims[i]), dtype,
                               minval=-bound, maxval=bound)
        b = jax.random.uniform(kb, (1, dims[i]), dtype,
                               minval=-bound, maxval=bound)
        params.extend([w, b])
    return tuple(params)


def prepare_out_head_params(params):
    """One-time (outside the hot path) conversion of weights to bf16 MXU
    operands; biases stay f32 for the VPU bias-add."""
    w1, b1, w2, b2, w3, b3 = params
    bf = jnp.bfloat16
    return (w1.astype(bf), b1, w2.astype(bf), b2, w3.astype(bf), b3)


def out_head_reference_f32(x, params):
    """Plain-JAX f32 reference matching the torch forward exactly."""
    w1, b1, w2, b2, w3, b3 = params
    h = x[..., None, :]                          # unsqueeze(-2)
    h = jnp.maximum(h @ w1 + b1, 0.0)
    h = jnp.maximum(h @ w2 + b2, 0.0)
    return h @ w3 + b3


def out_head_reference_matched(x, params):
    """Plain-JAX reference using the same bf16-operand / f32-accumulate scheme."""
    w1, b1, w2, b2, w3, b3 = params
    bf = jnp.bfloat16
    h = x[..., None, :].astype(bf)
    h = jnp.maximum(
        jnp.dot(h, w1.astype(bf), preferred_element_type=jnp.float32) + b1, 0.0)
    h = jnp.maximum(
        jnp.dot(h.astype(bf), w2.astype(bf),
                preferred_element_type=jnp.float32) + b2, 0.0)
    return jnp.dot(h.astype(bf), w3.astype(bf),
                   preferred_element_type=jnp.float32) + b3


if __name__ == "__main__":
    key = jax.random.PRNGKey(0)
    k_x, k_p = jax.random.split(key)

    T, B, in_dim = 8, 2, 32          # small decoded_feat: [T, B, dim]
    hid_dims = (512, 128)
    out_dim = 11

    x = jax.random.normal(k_x, (T, B, in_dim), dtype=jnp.float32)
    params_f32 = init_out_head_params(k_p, in_dim, hid_dims, out_dim)
    params = prepare_out_head_params(params_f32)   # bf16 weights, once

    out = out_head_forward(x, params)
    out = jax.block_until_ready(out)
    assert out.shape == (T, B, 1, out_dim), out.shape

    ref_matched = out_head_reference_matched(x, params_f32)
    ref_f32 = out_head_reference_f32(x, params_f32)
    assert jnp.allclose(out, ref_matched, atol=2e-3, rtol=2e-3), \
        "mismatch vs bf16-matched reference"
    assert jnp.allclose(out, ref_f32, atol=1e-1, rtol=1e-1), \
        "mismatch vs f32 reference"

    print("KERNEL_OK")
</pallas_src>

<mosaic_0001>
module attributes {stable_mosaic.version = 11 : i64} {
  func.func @_mlp_kernel(%arg0: i32, %arg1: memref<16x32xf32, #tpu.memory_space<vmem>>, %arg2: memref<32x512xbf16, #tpu.memory_space<vmem>>, %arg3: memref<1x512xf32, #tpu.memory_space<vmem>>, %arg4: memref<512x128xbf16, #tpu.memory_space<vmem>>, %arg5: memref<1x128xf32, #tpu.memory_space<vmem>>, %arg6: memref<128x11xbf16, #tpu.memory_space<vmem>>, %arg7: memref<1x11xf32, #tpu.memory_space<vmem>>, %arg8: memref<16x11xf32, #tpu.memory_space<vmem>>) attributes {dimension_semantics = [#tpu.dimension_semantics<parallel>], iteration_bounds = array<i64: 1>, scalar_prefetch = 0 : i64, scratch_operands = 0 : i64, tpu.core_type = #tpu.core_type<tc>, window_params = [{transform_indices = @transform_0, window_bounds = array<i64: 16, 32>}, {pipeline_mode = #tpu.pipeline_mode<synchronous>, transform_indices = @transform_1, window_bounds = array<i64: 32, 512>}, {pipeline_mode = #tpu.pipeline_mode<synchronous>, transform_indices = @transform_2, window_bounds = array<i64: 1, 512>}, {pipeline_mode = #tpu.pipeline_mode<synchronous>, transform_indices = @transform_3, window_bounds = array<i64: 512, 128>}, {pipeline_mode = #tpu.pipeline_mode<synchronous>, transform_indices = @transform_4, window_bounds = array<i64: 1, 128>}, {pipeline_mode = #tpu.pipeline_mode<synchronous>, transform_indices = @transform_5, window_bounds = array<i64: 128, 11>}, {pipeline_mode = #tpu.pipeline_mode<synchronous>, transform_indices = @transform_6, window_bounds = array<i64: 1, 11>}, {transform_indices = @transform_7, window_bounds = array<i64: 16, 11>}]} {
    %c0 = arith.constant 0 : index
    %c0_0 = arith.constant 0 : index
    %0 = vector.load %arg1[%c0, %c0_0] : memref<16x32xf32, #tpu.memory_space<vmem>>, vector<16x32xf32>
    %1 = arith.truncf %0 : vector<16x32xf32> to vector<16x32xbf16>
    %c0_1 = arith.constant 0 : index
    %c0_2 = arith.constant 0 : index
    %2 = vector.load %arg2[%c0_1, %c0_2] : memref<32x512xbf16, #tpu.memory_space<vmem>>, vector<32x512xbf16>
    %cst = arith.constant dense<0.000000e+00> : vector<16x512xf32>
    %3 = tpu.matmul %1, %2, %cst {dimension_numbers = #tpu.dot_dimension_numbers<[1], [0], [0], [1], [0, 0, 1, 1], [], []>} : vector<16x32xbf16>, vector<32x512xbf16>, vector<16x512xf32> -> vector<16x512xf32>
    %c0_3 = arith.constant 0 : index
    %c0_4 = arith.constant 0 : index
    %4 = vector.load %arg3[%c0_3, %c0_4] : memref<1x512xf32, #tpu.memory_space<vmem>>, vector<1x512xf32>
    %5 = vector.broadcast %4 : vector<1x512xf32> to vector<16x512xf32>
    %6 = arith.addf %3, %5 : vector<16x512xf32>
    %cst_5 = arith.constant 0.000000e+00 : f32
    %7 = vector.broadcast %cst_5 : f32 to vector<16x512xf32>
    %8 = arith.maximumf %6, %7 : vector<16x512xf32>
    %9 = arith.truncf %8 : vector<16x512xf32> to vector<16x512xbf16>
    %c0_6 = arith.constant 0 : index
    %c0_7 = arith.constant 0 : index
    %10 = vector.load %arg4[%c0_6, %c0_7] : memref<512x128xbf16, #tpu.memory_space<vmem>>, vector<512x128xbf16>
    %cst_8 = arith.constant dense<0.000000e+00> : vector<16x128xf32>
    %11 = tpu.matmul %9, %10, %cst_8 {dimension_numbers = #tpu.dot_dimension_numbers<[1], [0], [0], [1], [0, 0, 1, 1], [], []>} : vector<16x512xbf16>, vector<512x128xbf16>, vector<16x128xf32> -> vector<16x128xf32>
    %c0_9 = arith.constant 0 : index
    %c0_10 = arith.constant 0 : index
    %12 = vector.load %arg5[%c0_9, %c0_10] : memref<1x128xf32, #tpu.memory_space<vmem>>, vector<1x128xf32>
    %13 = vector.broadcast %12 : vector<1x128xf32> to vector<16x128xf32>
    %14 = arith.addf %11, %13 : vector<16x128xf32>
    %cst_11 = arith.constant 0.000000e+00 : f32
    %15 = vector.broadcast %cst_11 : f32 to vector<16x128xf32>
    %16 = arith.maximumf %14, %15 : vector<16x128xf32>
    %17 = arith.truncf %16 : vector<16x128xf32> to vector<16x128xbf16>
    %c0_12 = arith.constant 0 : index
    %c0_13 = arith.constant 0 : index
    %18 = vector.load %arg6[%c0_12, %c0_13] : memref<128x11xbf16, #tpu.memory_space<vmem>>, vector<128x11xbf16>
    %cst_14 = arith.constant dense<0.000000e+00> : vector<16x11xf32>
    %19 = tpu.matmul %17, %18, %cst_14 {dimension_numbers = #tpu.dot_dimension_numbers<[1], [0], [0], [1], [0, 0, 1, 1], [], []>} : vector<16x128xbf16>, vector<128x11xbf16>, vector<16x11xf32> -> vector<16x11xf32>
    %c0_15 = arith.constant 0 : index
    %c0_16 = arith.constant 0 : index
    %20 = vector.load %arg7[%c0_15, %c0_16] : memref<1x11xf32, #tpu.memory_space<vmem>>, vector<1x11xf32>
    %21 = vector.broadcast %20 : vector<1x11xf32> to vector<16x11xf32>
    %22 = arith.addf %19, %21 : vector<16x11xf32>
    %c0_17 = arith.constant 0 : index
    %c0_18 = arith.constant 0 : index
    %23 = vector.load %arg8[%c0_17, %c0_18] : memref<16x11xf32, #tpu.memory_space<vmem>>, vector<16x11xf32>
    tpu.vector_store %arg8[%c0_17, %c0_18], %22 {strides = array<i32>} : memref<16x11xf32, #tpu.memory_space<vmem>>, vector<16x11xf32>,
    return
  }
  func.func @transform_0(%arg0: i32) -> (i32, i32) {
    %c0_i32 = arith.constant 0 : i32
    %c0_i32_0 = arith.constant 0 : i32
    return %arg0, %c0_i32 : i32, i32
  }
  func.func @transform_1(%arg0: i32) -> (i32, i32) {
    %c0_i32 = arith.constant 0 : i32
    %c0_i32_0 = arith.constant 0 : i32
    %c0_i32_1 = arith.constant 0 : i32
    return %c0_i32, %c0_i32_0 : i32, i32
  }
  func.func @transform_2(%arg0: i32) -> (i32, i32) {
    %c0_i32 = arith.constant 0 : i32
    %c0_i32_0 = arith.constant 0 : i32
    %c0_i32_1 = arith.constant 0 : i32
    return %c0_i32, %c0_i32_0 : i32, i32
  }
  func.func @transform_3(%arg0: i32) -> (i32, i32) {
    %c0_i32 = arith.constant 0 : i32
    %c0_i32_0 = arith.constant 0 : i32
    %c0_i32_1 = arith.constant 0 : i32
    return %c0_i32, %c0_i32_0 : i32, i32
  }
  func.func @transform_4(%arg0: i32) -> (i32, i32) {
    %c0_i32 = arith.constant 0 : i32
    %c0_i32_0 = arith.constant 0 : i32
    %c0_i32_1 = arith.constant 0 : i32
    return %c0_i32, %c0_i32_0 : i32, i32
  }
  func.func @transform_5(%arg0: i32) -> (i32, i32) {
    %c0_i32 = arith.constant 0 : i32
    %c0_i32_0 = arith.constant 0 : i32
    %c0_i32_1 = arith.constant 0 : i32
    return %c0_i32, %c0_i32_0 : i32, i32
  }
  func.func @transform_6(%arg0: i32) -> (i32, i32) {
    %c0_i32 = arith.constant 0 : i32
    %c0_i32_0 = arith.constant 0 : i32
    %c0_i32_1 = arith.constant 0 : i32
    return %c0_i32, %c0_i32_0 : i32, i32
  }
  func.func @transform_7(%arg0: i32) -> (i32, i32) {
    %c0_i32 = arith.constant 0 : i32
    %c0_i32_0 = arith.constant 0 : i32
    return %arg0, %c0_i32 : i32, i32
  }
}

</mosaic_0001>

<llo_original>
// kernel: out_head_forward.1
$region0: #{out_head_forward.1}
  #allocation0 [shape = 'u32[]', space=smem, size = 0x4, offset = 0x4, fixed_abs, tag = 'smem constant byte address 0x4 - core index']
  #allocation1 [shape = 'u32[144,128]{1,0:T(1,128)}', space=vmem, size = 0x12000, scoped, tag = 'internal scratch']
  %s0 = inlined_call_operand.hbm [shape: f32[16,32], index: 0, kind: input, shape index: {}]
  %s1 = inlined_call_operand.hbm [shape: bf16[32,512], index: 1, kind: input, shape index: {}]
  %s2 = inlined_call_operand.hbm [shape: f32[1,512], index: 2, kind: input, shape index: {}]
  %s3 = inlined_call_operand.hbm [shape: bf16[512,128], index: 3, kind: input, shape index: {}]
  %s4 = inlined_call_operand.hbm [shape: f32[1,128], index: 4, kind: input, shape index: {}]
  %s5 = inlined_call_operand.hbm [shape: bf16[128,11], index: 5, kind: input, shape index: {}]
  %s6 = inlined_call_operand.hbm [shape: f32[1,11], index: 6, kind: input, shape index: {}]
  %s7 = inlined_call_operand.hbm [shape: f32[16,11], index: 7, kind: output, shape index: {}]
  %s8 = sld [smem:[#allocation0]]
  $region66: #{out_head_forward.1} parent=0
    _
  %s10 = ssub.s32 1, %s8
  %s11 = scalar_select 0, %s10, %s8
  $region1: #{out_head_forward.1} parent=0
    #allocation2 [shape = 'u8[8192]{0}', space=vmem, size = 0x2000, scoped, tag = 'input window, operand 0, single buffered']
    #allocation3 [shape = 's32[1]{0}', space=sflag, size = 0x4, scoped, tag = 'scoped memory for out_head_forward.1']
    #allocation4 [shape = 's32[1]{0}', space=sflag, size = 0x4, scoped, tag = 'scoped memory for out_head_forward.1']
    #allocation5 [shape = 'u8[32768]{0}', space=vmem, size = 0x8000, scoped, tag = 'input window, operand 1, single buffered']
    #allocation6 [shape = 's32[1]{0}', space=sflag, size = 0x4, scoped, tag = 'scoped memory for out_head_forward.1']
    #allocation7 [shape = 'u8[2048]{0}', space=vmem, size = 0x800, scoped, tag = 'input window, operand 2, single buffered']
    #allocation8 [shape = 'u8[131072]{0}', space=vmem, size = 0x20000, scoped, tag = 'input window, operand 3, single buffered']
    #allocation9 [shape = 's32[1]{0}', space=sflag, size = 0x4, scoped, tag = 'scoped memory for out_head_forward.1']
    #allocation10 [shape = 'u8[512]{0}', space=vmem, size = 0x400, scoped, tag = 'input window, operand 4, single buffered']
    #allocation11 [shape = 'u8[32768]{0}', space=vmem, size = 0x8000, scoped, tag = 'input window, operand 5, single buffered']
    #allocation12 [shape = 's32[1]{0}', space=sflag, size = 0x4, scoped, tag = 'scoped memory for out_head_forward.1']
    #allocation13 [shape = 'u8[512]{0}', space=vmem, size = 0x400, scoped, tag = 'input window, operand 6, single buffered']
    #allocation14 [shape = 'u8[8192]{0}', space=vmem, size = 0x2000, scoped, tag = 'output window, operand 0, single buffered']
    %12 = vsyncpa [#allocation3], 0
    %13 = vsyncpa [#allocation6], 0
    %14 = vsyncpa [#allocation9], 0
    %15 = vsyncpa [#allocation12], 0
    %16 = vsyncpa [#allocation4], 0
    // Predicated region
    $region2: #{out_head_forward.1} parent=1 // pred_check
      _
    $region3: #{out_head_forward.1} parent=1 // pred_check_branch
      %18 = sbr.rel (0) target = $region5
    $region4: #{out_head_forward.1} parent=1 // pred_region
      %s20 = ssub.s32 256, 256
      %21 = vsyncadd [#allocation3], %s20
      %s22 = sshll.u32 [#allocation2], 4
      %s23 = int_to_ptr.vmem [resolvable:$true] %s22
      %28 = dma.hbm_to_vmem [thread:$0]  %s0, 256, %s23, [#allocation3], 128, 128, 8
    $region5: #{out_head_forward.1} parent=1 // pred_fallthru
      _
    // Predicated region
    $region6: #{out_head_forward.1} parent=1 // pred_check
      _
    $region7: #{out_head_forward.1} parent=1 // pred_check_branch
      %30 = sbr.rel (0) target = $region9
    $region8: #{out_head_forward.1} parent=1 // pred_region
      %s32 = ssub.s32 1024, 1024
      %33 = vsyncadd [#allocation6], %s32
      %s34 = sshll.u32 [#allocation5], 4
      %s35 = int_to_ptr.vmem [resolvable:$true] %s34
      %40 = dma.hbm_to_vmem [thread:$0]  %s1, 1024, %s35, [#allocation6], 256, 256, 16
    $region9: #{out_head_forward.1} parent=1 // pred_fallthru
      _
    // Predicated region
    $region10: #{out_head_forward.1} parent=1 // pred_check
      _
    $region11: #{out_head_forward.1} parent=1 // pred_check_branch
      %42 = sbr.rel (0) target = $region13
    $region12: #{out_head_forward.1} parent=1 // pred_region
      %s44 = ssub.s32 64, 64
      %45 = vsyncadd [#allocation6], %s44
      %s47 = sshll.u32 [#allocation7], 4
      %s48 = int_to_ptr.vmem [resolvable:$true] %s47
      %50 = dma.hbm_to_vmem [thread:$0]  %s2, 64, %s48, [#allocation6]
    $region13: #{out_head_forward.1} parent=1 // pred_fallthru
      _
    // Predicated region
    $region14: #{out_head_forward.1} parent=1 // pred_check
      _
    $region15: #{out_head_forward.1} parent=1 // pred_check_branch
      %52 = sbr.rel (0) target = $region17
    $region16: #{out_head_forward.1} parent=1 // pred_region
      %s54 = ssub.s32 4096, 4096
      %55 = vsyncadd [#allocation9], %s54
      %s56 = sshll.u32 [#allocation8], 4
      %s57 = int_to_ptr.vmem [resolvable:$true] %s56
      %62 = dma.hbm_to_vmem [thread:$0]  %s3, 4096, %s57, [#allocation9], 64, 64, 4
    $region17: #{out_head_forward.1} parent=1 // pred_fallthru
      _
    // Predicated region
    $region18: #{out_head_forward.1} parent=1 // pred_check
      _
    $region19: #{out_head_forward.1} parent=1 // pred_check_branch
      %64 = sbr.rel (0) target = $region21
    $region20: #{out_head_forward.1} parent=1 // pred_region
      %s66 = ssub.s32 16, 16
      %67 = vsyncadd [#allocation9], %s66
      %s69 = sshll.u32 [#allocation10], 4
      %s70 = int_to_ptr.vmem [resolvable:$true] %s69
      %72 = dma.hbm_to_vmem [thread:$0]  %s4, 16, %s70, [#allocation9]
    $region21: #{out_head_forward.1} parent=1 // pred_fallthru
      _
    // Predicated region
    $region22: #{out_head_forward.1} parent=1 // pred_check
      _
    $region23: #{out_head_forward.1} parent=1 // pred_check_branch
      %74 = sbr.rel (0) target = $region25
    $region24: #{out_head_forward.1} parent=1 // pred_region
      %s76 = ssub.s32 1024, 1024
      %77 = vsyncadd [#allocation12], %s76
      %s78 = sshll.u32 [#allocation11], 4
      %s79 = int_to_ptr.vmem [resolvable:$true] %s78
      %84 = dma.hbm_to_vmem [thread:$0]  %s5, 1024, %s79, [#allocation12], 64, 64, 4
    $region25: #{out_head_forward.1} parent=1 // pred_fallthru
      _
    // Predicated region
    $region26: #{out_head_forward.1} parent=1 // pred_check
      _
    $region27: #{out_head_forward.1} parent=1 // pred_check_branch
      %86 = sbr.rel (0) target = $region29
    $region28: #{out_head_forward.1} parent=1 // pred_region
      %s88 = ssub.s32 16, 16
      %89 = vsyncadd [#allocation12], %s88
      %s91 = sshll.u32 [#allocation13], 4
      %s92 = int_to_ptr.vmem [resolvable:$true] %s91
      %94 = dma.hbm_to_vmem [thread:$0]  %s6, 16, %s92, [#allocation12]
    $region29: #{out_head_forward.1} parent=1 // pred_fallthru
      _
    // Predicated region
    $region30: #{out_head_forward.1} parent=1 // pred_check
      _
    $region31: #{out_head_forward.1} parent=1 // pred_check_branch
      %96 = sbr.rel (0) target = $region33
    $region32: #{out_head_forward.1} parent=1 // pred_region
      %97 = dma.done [#allocation3], 256
    $region33: #{out_head_forward.1} parent=1 // pred_fallthru
      _
    // Predicated region
    $region34: #{out_head_forward.1} parent=1 // pred_check
      _
    $region35: #{out_head_forward.1} parent=1 // pred_check_branch
      %99 = sbr.rel (0) target = $region37
    $region36: #{out_head_forward.1} parent=1 // pred_region
      %100 = dma.done [#allocation6], 1024
    $region37: #{out_head_forward.1} parent=1 // pred_fallthru
      _
    // Predicated region
    $region38: #{out_head_forward.1} parent=1 // pred_check
      _
    $region39: #{out_head_forward.1} parent=1 // pred_check_branch
      %102 = sbr.rel (0) target = $region41
    $region40: #{out_head_forward.1} parent=1 // pred_region
      %103 = dma.done [#allocation6], 64
    $region41: #{out_head_forward.1} parent=1 // pred_fallthru
      _
    // Predicated region
    $region42: #{out_head_forward.1} parent=1 // pred_check
      _
    $region43: #{out_head_forward.1} parent=1 // pred_check_branch
      %105 = sbr.rel (0) target = $region45
    $region44: #{out_head_forward.1} parent=1 // pred_region
      %106 = dma.done [#allocation9], 4096
    $region45: #{out_head_forward.1} parent=1 // pred_fallthru
      _
    // Predicated region
    $region46: #{out_head_forward.1} parent=1 // pred_check
      _
    $region47: #{out_head_forward.1} parent=1 // pred_check_branch
      %108 = sbr.rel (0) target = $region49
    $region48: #{out_head_forward.1} parent=1 // pred_region
      %109 = dma.done [#allocation9], 16
    $region49: #{out_head_forward.1} parent=1 // pred_fallthru
      _
    // Predicated region
    $region50: #{out_head_forward.1} parent=1 // pred_check
      _
    $region51: #{out_head_forward.1} parent=1 // pred_check_branch
      %111 = sbr.rel (0) target = $region53
    $region52: #{out_head_forward.1} parent=1 // pred_region
      %112 = dma.done [#allocation12], 1024
    $region53: #{out_head_forward.1} parent=1 // pred_fallthru
      _
    // Predicated region
    $region54: #{out_head_forward.1} parent=1 // pred_check
      _
    $region55: #{out_head_forward.1} parent=1 // pred_check_branch
      %114 = sbr.rel (0) target = $region57
    $region56: #{out_head_forward.1} parent=1 // pred_region
      %115 = dma.done [#allocation12], 16
    $region57: #{out_head_forward.1} parent=1 // pred_fallthru
      _
    %v117 = vld [vmem:[#allocation2] sm:$0xff]
    %v118 = vld [vmem:[#allocation2 + $0x8] sm:$0xff]
    %v119 = vpack.c.bf16 %v118, %v117
    %v120 = vld [vmem:[#allocation5] sm:$0xff]
    %v121 = vld [vmem:[#allocation5 + $0x8] sm:$0xff]
    %v122 = vld [vmem:[#allocation5 + $0x10] sm:$0xff]
    %v123 = vld [vmem:[#allocation5 + $0x18] sm:$0xff]
    %v124 = vld [vmem:[#allocation5 + $0x20] sm:$0xff]
    %v125 = vld [vmem:[#allocation5 + $0x28] sm:$0xff]
    %v126 = vld [vmem:[#allocation5 + $0x30] sm:$0xff]
    %v127 = vld [vmem:[#allocation5 + $0x38] sm:$0xff]
    %v128 = vld [vmem:[#allocation7] sm:$0xf]
    %v130 = vlaneseq
    %v131 = vshrl.u32 %v130, 7
    %v132 = vsub.s32 0, %v131
    %v133 = vrot.slane %v128, %v132
    %v134 = vlaneseq
    %v135 = vshrl.u32 %v134, 7
    %v136 = vsub.s32 1, %v135
    %v137 = vrot.slane %v128, %v136
    %v138 = vlaneseq
    %v139 = vshrl.u32 %v138, 7
    %v140 = vsub.s32 2, %v139
    %v141 = vrot.slane %v128, %v140
    %v142 = vlaneseq
    %v143 = vshrl.u32 %v142, 7
    %v144 = vsub.s32 3, %v143
    %v145 = vrot.slane %v128, %v144
    %v158 = vunpack.c.l.b16 %v120
    %v159 = vunpack.c.h.b16 %v120
    %v160 = vunpack.c.l.b16 %v121
    %v161 = vunpack.c.h.b16 %v121
    %v162 = vunpack.c.l.b16 %v122
    %v163 = vunpack.c.h.b16 %v122
    %v164 = vunpack.c.l.b16 %v123
    %v165 = vunpack.c.h.b16 %v123
    %v166 = vunpack.c.l.b16 %v124
    %v167 = vunpack.c.h.b16 %v124
    %v168 = vunpack.c.l.b16 %v125
    %v169 = vunpack.c.h.b16 %v125
    %v170 = vunpack.c.l.b16 %v126
    %v171 = vunpack.c.h.b16 %v126
    %v172 = vunpack.c.l.b16 %v127
    %v173 = vunpack.c.h.b16 %v127
    %v174 = vpack.c.b16 %v162, %v158
    %v175 = vpack.c.b16 %v163, %v159
    %v176 = vpack.c.b16 %v164, %v160
    %v177 = vpack.c.b16 %v165, %v161
    %v178 = vpack.c.b16 %v170, %v166
    %v179 = vpack.c.b16 %v171, %v167
    %v180 = vpack.c.b16 %v172, %v168
    %v181 = vpack.c.b16 %v173, %v169
    %vm190 = vcmask 261120
    %v192 = vsel %vm190, %v119, 0
    %194 = vmatprep.subr.bf16.mxu0 %v175
    %195 = vmatpush1.bf16.msra.mxu0 %v174
    %196 = vmatprep.subr.bf16.mxu0 %v179
    %197 = vmatpush1.bf16.msra.mxu0 %v178
    %198 = vmatprep.subr.bf16.mxu0 0
    %199 = vmatpush1.bf16.msra.mxu0 0
    %200 = vmatprep.subr.bf16.mxu0 0
    %201 = vmatpush1.bf16.msra.mxu0 0
    %202 = vmatprep.subr.bf16.mxu0 0
    %203 = vmatpush1.bf16.msra.mxu0 0
    %204 = vmatprep.subr.bf16.mxu0 0
    %205 = vmatpush1.bf16.msra.mxu0 0
    %206 = vmatprep.subr.bf16.mxu0 0
    %207 = vmatpush1.bf16.msra.mxu0 0
    %208 = vmatprep.subr.bf16.mxu0 0
    %209 = vmatpush1.bf16.msra.mxu0 0
    %210 = vmatprep.subr.bf16.mxu0 0
    %211 = vmatpush1.bf16.msra.mxu0 0
    %212 = vmatprep.subr.bf16.mxu0 0
    %213 = vmatpush1.bf16.msra.mxu0 0
    %214 = vmatprep.subr.bf16.mxu0 0
    %215 = vmatpush1.bf16.msra.mxu0 0
    %216 = vmatprep.subr.bf16.mxu0 0
    %217 = vmatpush1.bf16.msra.mxu0 0
    %218 = vmatprep.subr.bf16.mxu0 0
    %219 = vmatpush1.bf16.msra.mxu0 0
    %220 = vmatprep.subr.bf16.mxu0 0
    %221 = vmatpush1.bf16.msra.mxu0 0
    %222 = vmatprep.subr.bf16.mxu0 0
    %223 = vmatpush1.bf16.msra.mxu0 0
    %224 = vmatprep.subr.bf16.mxu0 0
    %225 = vmatpush1.bf16.msra.mxu0 0
    %226 = vmatprep.mubr.bf16.mxu0 0
    %227 = vmatmul.mubr.bf16.gmra.mrb[0].mxu0 %v192
    %v228 = vpop.f32.mrb[0].mxu0
    %v229 = vadd.f32 %v133, %v228
    %v230 = vpop.f32.mrb[0].mxu0
    %v231 = vadd.f32 %v137, %v230
    %v232 = vpop.f32.mrb[0].mxu0
    %v233 = vadd.f32 %v133, %v232
    %v234 = vpop.f32.mrb[0].mxu0
    %v235 = vadd.f32 %v137, %v234
    %236 = vdwg.mxu0
    %237 = vmatprep.subr.bf16.mxu0 %v177
    %238 = vmatpush1.bf16.msra.mxu0 %v176
    %239 = vmatprep.subr.bf16.mxu0 %v181
    %240 = vmatpush1.bf16.msra.mxu0 %v180
    %241 = vmatprep.subr.bf16.mxu0 0
    %242 = vmatpush1.bf16.msra.mxu0 0
    %243 = vmatprep.subr.bf16.mxu0 0
    %244 = vmatpush1.bf16.msra.mxu0 0
    %245 = vmatprep.subr.bf16.mxu0 0
    %246 = vmatpush1.bf16.msra.mxu0 0
    %247 = vmatprep.subr.bf16.mxu0 0
    %248 = vmatpush1.bf16.msra.mxu0 0
    %249 = vmatprep.subr.bf16.mxu0 0
    %250 = vmatpush1.bf16.msra.mxu0 0
    %251 = vmatprep.subr.bf16.mxu0 0
    %252 = vmatpush1.bf16.msra.mxu0 0
    %253 = vmatprep.subr.bf16.mxu0 0
    %254 = vmatpush1.bf16.msra.mxu0 0
    %255 = vmatprep.subr.bf16.mxu0 0
    %256 = vmatpush1.bf16.msra.mxu0 0
    %257 = vmatprep.subr.bf16.mxu0 0
    %258 = vmatpush1.bf16.msra.mxu0 0
    %259 = vmatprep.subr.bf16.mxu0 0
    %260 = vmatpush1.bf16.msra.mxu0 0
    %261 = vmatprep.subr.bf16.mxu0 0
    %262 = vmatpush1.bf16.msra.mxu0 0
    %263 = vmatprep.subr.bf16.mxu0 0
    %264 = vmatpush1.bf16.msra.mxu0 0
    %265 = vmatprep.subr.bf16.mxu0 0
    %266 = vmatpush1.bf16.msra.mxu0 0
    %267 = vmatprep.subr.bf16.mxu0 0
    %268 = vmatpush1.bf16.msra.mxu0 0
    %269 = vmatprep.mubr.bf16.mxu0 0
    %270 = vmatmul.mubr.bf16.gmra.mrb[0].mxu0 %v192
    %v271 = vpop.f32.mrb[0].mxu0
    %v272 = vadd.f32 %v141, %v271
    %v273 = vpop.f32.mrb[0].mxu0
    %v274 = vadd.f32 %v145, %v273
    %v275 = vpop.f32.mrb[0].mxu0
    %v276 = vadd.f32 %v141, %v275
    %v277 = vpop.f32.mrb[0].mxu0
    %v278 = vadd.f32 %v145, %v277
    %279 = vdwg.mxu0
    %v280 = vmax.f32 %v229, 0.0
    %v281 = vmax.f32 %v231, 0.0
    %v282 = vmax.f32 %v272, 0.0
    %v283 = vmax.f32 %v274, 0.0
    %v284 = vmax.f32 %v233, 0.0
    %v285 = vmax.f32 %v235, 0.0
    %v286 = vmax.f32 %v276, 0.0
    %v287 = vmax.f32 %v278, 0.0
    %v288 = vpack.c.bf16 %v284, %v280
    %v289 = vpack.c.bf16 %v285, %v281
    %v290 = vpack.c.bf16 %v286, %v282
    %v291 = vpack.c.bf16 %v287, %v283
    %v292 = vld [vmem:[#allocation8] sm:$0xf]
    %v293 = vld [vmem:[#allocation8 + $0x4] sm:$0xf]
    %v294 = vld [vmem:[#allocation8 + $0x8] sm:$0xf]
    %v295 = vld [vmem:[#allocation8 + $0xc] sm:$0xf]
    %v296 = vld [vmem:[#allocation8 + $0x10] sm:$0xf]
    %v297 = vld [vmem:[#allocation8 + $0x14] sm:$0xf]
    %v298 = vld [vmem:[#allocation8 + $0x18] sm:$0xf]
    %v299 = vld [vmem:[#allocation8 + $0x1c] sm:$0xf]
    %v300 = vld [vmem:[#allocation8 + $0x20] sm:$0xf]
    %v301 = vld [vmem:[#allocation8 + $0x24] sm:$0xf]
    %v302 = vld [vmem:[#allocation8 + $0x28] sm:$0xf]
    %v303 = vld [vmem:[#allocation8 + $0x2c] sm:$0xf]
    %v304 = vld [vmem:[#allocation8 + $0x30] sm:$0xf]
    %v305 = vld [vmem:[#allocation8 + $0x34] sm:$0xf]
    %v306 = vld [vmem:[#allocation8 + $0x38] sm:$0xf]
    %v307 = vld [vmem:[#allocation8 + $0x3c] sm:$0xf]
    %v308 = vld [vmem:[#allocation8 + $0x40] sm:$0xf]
    %v309 = vld [vmem:[#allocation8 + $0x44] sm:$0xf]
    %v310 = vld [vmem:[#allocation8 + $0x48] sm:$0xf]
    %v311 = vld [vmem:[#allocation8 + $0x4c] sm:$0xf]
    %v312 = vld [vmem:[#allocation8 + $0x50] sm:$0xf]
    %v313 = vld [vmem:[#allocation8 + $0x54] sm:$0xf]
    %v314 = vld [vmem:[#allocation8 + $0x58] sm:$0xf]
    %v315 = vld [vmem:[#allocation8 + $0x5c] sm:$0xf]
    %v316 = vld [vmem:[#allocation8 + $0x60] sm:$0xf]
    %v317 = vld [vmem:[#allocation8 + $0x64] sm:$0xf]
    %v318 = vld [vmem:[#allocation8 + $0x68] sm:$0xf]
    %v319 = vld [vmem:[#allocation8 + $0x6c] sm:$0xf]
    %v320 = vld [vmem:[#allocation8 + $0x70] sm:$0xf]
    %v321 = vld [vmem:[#allocation8 + $0x74] sm:$0xf]
    %v322 = vld [vmem:[#allocation8 + $0x78] sm:$0xf]
    %v323 = vld [vmem:[#allocation8 + $0x7c] sm:$0xf]
    %v324 = vld [vmem:[#allocation8 + $0x80] sm:$0xf]
    %v325 = vld [vmem:[#allocation8 + $0x84] sm:$0xf]
    %v326 = vld [vmem:[#allocation8 + $0x88] sm:$0xf]
    %v327 = vld [vmem:[#allocation8 + $0x8c] sm:$0xf]
    %v328 = vld [vmem:[#allocation8 + $0x90] sm:$0xf]
    %v329 = vld [vmem:[#allocation8 + $0x94] sm:$0xf]
    %v330 = vld [vmem:[#allocation8 + $0x98] sm:$0xf]
    %v331 = vld [vmem:[#allocation8 + $0x9c] sm:$0xf]
    %v332 = vld [vmem:[#allocation8 + $0xa0] sm:$0xf]
    %v333 = vld [vmem:[#allocation8 + $0xa4] sm:$0xf]
    %v334 = vld [vmem:[#allocation8 + $0xa8] sm:$0xf]
    %v335 = vld [vmem:[#allocation8 + $0xac] sm:$0xf]
    %v336 = vld [vmem:[#allocation8 + $0xb0] sm:$0xf]
    %v337 = vld [vmem:[#allocation8 + $0xb4] sm:$0xf]
    %v338 = vld [vmem:[#allocation8 + $0xb8] sm:$0xf]
    %v339 = vld [vmem:[#allocation8 + $0xbc] sm:$0xf]
    %v340 = vld [vmem:[#allocation8 + $0xc0] sm:$0xf]
    %v341 = vld [vmem:[#allocation8 + $0xc4] sm:$0xf]
    %v342 = vld [vmem:[#allocation8 + $0xc8] sm:$0xf]
    %v343 = vld [vmem:[#allocation8 + $0xcc] sm:$0xf]
    %v344 = vld [vmem:[#allocation8 + $0xd0] sm:$0xf]
    %v345 = vld [vmem:[#allocation8 + $0xd4] sm:$0xf]
    %v346 = vld [vmem:[#allocation8 + $0xd8] sm:$0xf]
    %v347 = vld [vmem:[#allocation8 + $0xdc] sm:$0xf]
    %v348 = vld [vmem:[#allocation8 + $0xe0] sm:$0xf]
    %v349 = vld [vmem:[#allocation8 + $0xe4] sm:$0xf]
    %v350 = vld [vmem:[#allocation8 + $0xe8] sm:$0xf]
    %v351 = vld [vmem:[#allocation8 + $0xec] sm:$0xf]
    %v352 = vld [vmem:[#allocation8 + $0xf0] sm:$0xf]
    %v353 = vld [vmem:[#allocation8 + $0xf4] sm:$0xf]
    %v354 = vld [vmem:[#allocation8 + $0xf8] sm:$0xf]
    %v355 = vld [vmem:[#allocation8 + $0xfc] sm:$0xf]
    %v356 = vld [vmem:[#allocation10] sm:$0x1]
    %v358 = vlaneseq
    %v359 = vshrl.u32 %v358, 7
    %v360 = vsub.s32 0, %v359
    %v361 = vrot.slane %v356, %v360
    %v427 = vunpack.c.l.b16 %v292
    %v428 = vunpack.c.l.b16 %v293
    %v429 = vunpack.c.l.b16 %v294
    %v430 = vunpack.c.l.b16 %v295
    %v431 = vunpack.c.l.b16 %v296
    %v432 = vunpack.c.l.b16 %v297
    %v433 = vunpack.c.l.b16 %v298
    %v434 = vunpack.c.l.b16 %v299
    %v435 = vunpack.c.l.b16 %v300
    %v436 = vunpack.c.l.b16 %v301
    %v437 = vunpack.c.l.b16 %v302
    %v438 = vunpack.c.l.b16 %v303
    %v439 = vunpack.c.l.b16 %v304
    %v440 = vunpack.c.l.b16 %v305
    %v441 = vunpack.c.l.b16 %v306
    %v442 = vunpack.c.l.b16 %v307
    %v443 = vunpack.c.l.b16 %v308
    %v444 = vunpack.c.l.b16 %v309
    %v445 = vunpack.c.l.b16 %v310
    %v446 = vunpack.c.l.b16 %v311
    %v447 = vunpack.c.l.b16 %v312
    %v448 = vunpack.c.l.b16 %v313
    %v449 = vunpack.c.l.b16 %v314
    %v450 = vunpack.c.l.b16 %v315
    %v451 = vunpack.c.l.b16 %v316
    %v452 = vunpack.c.l.b16 %v317
    %v453 = vunpack.c.l.b16 %v318
    %v454 = vunpack.c.l.b16 %v319
    %v455 = vunpack.c.l.b16 %v320
    %v456 = vunpack.c.l.b16 %v321
    %v457 = vunpack.c.l.b16 %v322
    %v458 = vunpack.c.l.b16 %v323
    %v459 = vunpack.c.l.b16 %v324
    %v460 = vunpack.c.l.b16 %v325
    %v461 = vunpack.c.l.b16 %v326
    %v462 = vunpack.c.l.b16 %v327
    %v463 = vunpack.c.l.b16 %v328
    %v464 = vunpack.c.l.b16 %v329
    %v465 = vunpack.c.l.b16 %v330
    %v466 = vunpack.c.l.b16 %v331
    %v467 = vunpack.c.l.b16 %v332
    %v468 = vunpack.c.l.b16 %v333
    %v469 = vunpack.c.l.b16 %v334
    %v470 = vunpack.c.l.b16 %v335
    %v471 = vunpack.c.l.b16 %v336
    %v472 = vunpack.c.l.b16 %v337
    %v473 = vunpack.c.l.b16 %v338
    %v474 = vunpack.c.l.b16 %v339
    %v475 = vunpack.c.l.b16 %v340
    %v476 = vunpack.c.l.b16 %v341
    %v477 = vunpack.c.l.b16 %v342
    %v478 = vunpack.c.l.b16 %v343
    %v479 = vunpack.c.l.b16 %v344
    %v480 = vunpack.c.l.b16 %v345
    %v481 = vunpack.c.l.b16 %v346
    %v482 = vunpack.c.l.b16 %v347
    %v483 = vunpack.c.l.b16 %v348
    %v484 = vunpack.c.l.b16 %v349
    %v485 = vunpack.c.l.b16 %v350
    %v486 = vunpack.c.l.b16 %v351
    %v487 = vunpack.c.l.b16 %v352
    %v488 = vunpack.c.l.b16 %v353
    %v489 = vunpack.c.l.b16 %v354
    %v490 = vunpack.c.l.b16 %v355
    %v491 = vpack.c.b16 %v428, %v427
    %v492 = vpack.c.b16 %v430, %v429
    %v493 = vpack.c.b16 %v432, %v431
    %v494 = vpack.c.b16 %v434, %v433
    %v495 = vpack.c.b16 %v436, %v435
    %v496 = vpack.c.b16 %v438, %v437
    %v497 = vpack.c.b16 %v440, %v439
    %v498 = vpack.c.b16 %v442, %v441
    %v499 = vpack.c.b16 %v444, %v443
    %v500 = vpack.c.b16 %v446, %v445
    %v501 = vpack.c.b16 %v448, %v447
    %v502 = vpack.c.b16 %v450, %v449
    %v503 = vpack.c.b16 %v452, %v451
    %v504 = vpack.c.b16 %v454, %v453
    %v505 = vpack.c.b16 %v456, %v455
    %v506 = vpack.c.b16 %v458, %v457
    %v507 = vpack.c.b16 %v460, %v459
    %v508 = vpack.c.b16 %v462, %v461
    %v509 = vpack.c.b16 %v464, %v463
    %v510 = vpack.c.b16 %v466, %v465
    %v511 = vpack.c.b16 %v468, %v467
    %v512 = vpack.c.b16 %v470, %v469
    %v513 = vpack.c.b16 %v472, %v471
    %v514 = vpack.c.b16 %v474, %v473
    %v515 = vpack.c.b16 %v476, %v475
    %v516 = vpack.c.b16 %v478, %v477
    %v517 = vpack.c.b16 %v480, %v479
    %v518 = vpack.c.b16 %v482, %v481
    %v519 = vpack.c.b16 %v484, %v483
    %v520 = vpack.c.b16 %v486, %v485
    %v521 = vpack.c.b16 %v488, %v487
    %v522 = vpack.c.b16 %v490, %v489
    %555 = vmatprep.subr.bf16.mxu0 0
    %556 = vmatpush1.bf16.msra.mxu0 %v491
    %557 = vmatprep.subr.bf16.mxu0 0
    %558 = vmatpush1.bf16.msra.mxu0 %v492
    %559 = vmatprep.subr.bf16.mxu0 0
    %560 = vmatpush1.bf16.msra.mxu0 %v493
    %561 = vmatprep.subr.bf16.mxu0 0
    %562 = vmatpush1.bf16.msra.mxu0 %v494
    %563 = vmatprep.subr.bf16.mxu0 0
    %564 = vmatpush1.bf16.msra.mxu0 %v495
    %565 = vmatprep.subr.bf16.mxu0 0
    %566 = vmatpush1.bf16.msra.mxu0 %v496
    %567 = vmatprep.subr.bf16.mxu0 0
    %568 = vmatpush1.bf16.msra.mxu0 %v497
    %569 = vmatprep.subr.bf16.mxu0 0
    %570 = vmatpush1.bf16.msra.mxu0 %v498
    %571 = vmatprep.subr.bf16.mxu0 0
    %572 = vmatpush1.bf16.msra.mxu0 %v499
    %573 = vmatprep.subr.bf16.mxu0 0
    %574 = vmatpush1.bf16.msra.mxu0 %v500
    %575 = vmatprep.subr.bf16.mxu0 0
    %576 = vmatpush1.bf16.msra.mxu0 %v501
    %577 = vmatprep.subr.bf16.mxu0 0
    %578 = vmatpush1.bf16.msra.mxu0 %v502
    %579 = vmatprep.subr.bf16.mxu0 0
    %580 = vmatpush1.bf16.msra.mxu0 %v503
    %581 = vmatprep.subr.bf16.mxu0 0
    %582 = vmatpush1.bf16.msra.mxu0 %v504
    %583 = vmatprep.subr.bf16.mxu0 0
    %584 = vmatpush1.bf16.msra.mxu0 %v505
    %585 = vmatprep.subr.bf16.mxu0 0
    %586 = vmatpush1.bf16.msra.mxu0 %v506
    %587 = vmatprep.mubr.bf16.mxu0 %v289
    %588 = vmatmul.mubr.bf16.gmra.mrb[0].mxu0 %v288
    %v589 = vpop.f32.mrb[0].mxu0
    %v590 = vadd.f32 %v361, %v589
    %v591 = vpop.f32.mrb[0].mxu0
    %v592 = vpop.f32.mrb[0].mxu0
    %v593 = vadd.f32 %v361, %v592
    %v594 = vpop.f32.mrb[0].mxu0
    %595 = vdwg.mxu0
    %596 = vmatprep.subr.bf16.mxu0 0
    %597 = vmatpush1.bf16.msra.mxu0 %v507
    %598 = vmatprep.subr.bf16.mxu0 0
    %599 = vmatpush1.bf16.msra.mxu0 %v508
    %600 = vmatprep.subr.bf16.mxu0 0
    %601 = vmatpush1.bf16.msra.mxu0 %v509
    %602 = vmatprep.subr.bf16.mxu0 0
    %603 = vmatpush1.bf16.msra.mxu0 %v510
    %604 = vmatprep.subr.bf16.mxu0 0
    %605 = vmatpush1.bf16.msra.mxu0 %v511
    %606 = vmatprep.subr.bf16.mxu0 0
    %607 = vmatpush1.bf16.msra.mxu0 %v512
    %608 = vmatprep.subr.bf16.mxu0 0
    %609 = vmatpush1.bf16.msra.mxu0 %v513
    %610 = vmatprep.subr.bf16.mxu0 0
    %611 = vmatpush1.bf16.msra.mxu0 %v514
    %612 = vmatprep.subr.bf16.mxu0 0
    %613 = vmatpush1.bf16.msra.mxu0 %v515
    %614 = vmatprep.subr.bf16.mxu0 0
    %615 = vmatpush1.bf16.msra.mxu0 %v516
    %616 = vmatprep.subr.bf16.mxu0 0
    %617 = vmatpush1.bf16.msra.mxu0 %v517
    %618 = vmatprep.subr.bf16.mxu0 0
    %619 = vmatpush1.bf16.msra.mxu0 %v518
    %620 = vmatprep.subr.bf16.mxu0 0
    %621 = vmatpush1.bf16.msra.mxu0 %v519
    %622 = vmatprep.subr.bf16.mxu0 0
    %623 = vmatpush1.bf16.msra.mxu0 %v520
    %624 = vmatprep.subr.bf16.mxu0 0
    %625 = vmatpush1.bf16.msra.mxu0 %v521
    %626 = vmatprep.subr.bf16.mxu0 0
    %627 = vmatpush1.bf16.msra.mxu0 %v522
    %628 = vmatprep.mubr.bf16.mxu0 %v291
    %629 = vmatmul.mubr.bf16.gmra.mrb[0].mxu0 %v290
    %v630 = vpop.f32.mrb[0].mxu0
    %v631 = vadd.f32 %v590, %v630
    %v632 = vpop.f32.mrb[0].mxu0
    %v633 = vpop.f32.mrb[0].mxu0
    %v634 = vadd.f32 %v593, %v633
    %v635 = vpop.f32.mrb[0].mxu0
    %636 = vdwg.mxu0
    %v637 = vmax.f32 %v631, 0.0
    %v638 = vmax.f32 %v634, 0.0
    %v639 = vpack.c.bf16 %v638, %v637
    %v640 = vld [vmem:[#allocation11] sm:$0xf]
    %v641 = vld [vmem:[#allocation11 + $0x4] sm:$0xf]
    %v642 = vld [vmem:[#allocation11 + $0x8] sm:$0xf]
    %v643 = vld [vmem:[#allocation11 + $0xc] sm:$0xf]
    %v644 = vld [vmem:[#allocation11 + $0x10] sm:$0xf]
    %v645 = vld [vmem:[#allocation11 + $0x14] sm:$0xf]
    %v646 = vld [vmem:[#allocation11 + $0x18] sm:$0xf]
    %v647 = vld [vmem:[#allocation11 + $0x1c] sm:$0xf]
    %v648 = vld [vmem:[#allocation11 + $0x20] sm:$0xf]
    %v649 = vld [vmem:[#allocation11 + $0x24] sm:$0xf]
    %v650 = vld [vmem:[#allocation11 + $0x28] sm:$0xf]
    %v651 = vld [vmem:[#allocation11 + $0x2c] sm:$0xf]
    %v652 = vld [vmem:[#allocation11 + $0x30] sm:$0xf]
    %v653 = vld [vmem:[#allocation11 + $0x34] sm:$0xf]
    %v654 = vld [vmem:[#allocation11 + $0x38] sm:$0xf]
    %v655 = vld [vmem:[#allocation11 + $0x3c] sm:$0xf]
    %v656 = vld [vmem:[#allocation13] sm:$0x1]
    %v658 = vlaneseq
    %v659 = vshrl.u32 %v658, 7
    %v660 = vsub.s32 0, %v659
    %v661 = vrot.slane %v656, %v660
    %v679 = vunpack.c.l.b16 %v640
    %v680 = vunpack.c.l.b16 %v641
    %v681 = vunpack.c.l.b16 %v642
    %v682 = vunpack.c.l.b16 %v643
    %v683 = vunpack.c.l.b16 %v644
    %v684 = vunpack.c.l.b16 %v645
    %v685 = vunpack.c.l.b16 %v646
    %v686 = vunpack.c.l.b16 %v647
    %v687 = vunpack.c.l.b16 %v648
    %v688 = vunpack.c.l.b16 %v649
    %v689 = vunpack.c.l.b16 %v650
    %v690 = vunpack.c.l.b16 %v651
    %v691 = vunpack.c.l.b16 %v652
    %v692 = vunpack.c.l.b16 %v653
    %v693 = vunpack.c.l.b16 %v654
    %v694 = vunpack.c.l.b16 %v655
    %v695 = vpack.c.b16 %v680, %v679
    %v696 = vpack.c.b16 %v682, %v681
    %v697 = vpack.c.b16 %v684, %v683
    %v698 = vpack.c.b16 %v686, %v685
    %v699 = vpack.c.b16 %v688, %v687
    %v700 = vpack.c.b16 %v690, %v689
    %v701 = vpack.c.b16 %v692, %v691
    %v702 = vpack.c.b16 %v694, %v693
    %711 = vmatprep.subr.bf16.mxu0 0
    %712 = vmatpush1.bf16.msra.mxu0 %v695
    %713 = vmatprep.subr.bf16.mxu0 0
    %714 = vmatpush1.bf16.msra.mxu0 %v696
    %715 = vmatprep.subr.bf16.mxu0 0
    %716 = vmatpush1.bf16.msra.mxu0 %v697
    %717 = vmatprep.subr.bf16.mxu0 0
    %718 = vmatpush1.bf16.msra.mxu0 %v698
    %719 = vmatprep.subr.bf16.mxu0 0
    %720 = vmatpush1.bf16.msra.mxu0 %v699
    %721 = vmatprep.subr.bf16.mxu0 0
    %722 = vmatpush1.bf16.msra.mxu0 %v700
    %723 = vmatprep.subr.bf16.mxu0 0
    %724 = vmatpush1.bf16.msra.mxu0 %v701
    %725 = vmatprep.subr.bf16.mxu0 0
    %726 = vmatpush1.bf16.msra.mxu0 %v702
    %727 = vmatprep.subr.bf16.mxu0 0
    %728 = vmatpush1.bf16.msra.mxu0 0
    %729 = vmatprep.subr.bf16.mxu0 0
    %730 = vmatpush1.bf16.msra.mxu0 0
    %731 = vmatprep.subr.bf16.mxu0 0
    %732 = vmatpush1.bf16.msra.mxu0 0
    %733 = vmatprep.subr.bf16.mxu0 0
    %734 = vmatpush1.bf16.msra.mxu0 0
    %735 = vmatprep.subr.bf16.mxu0 0
    %736 = vmatpush1.bf16.msra.mxu0 0
    %737 = vmatprep.subr.bf16.mxu0 0
    %738 = vmatpush1.bf16.msra.mxu0 0
    %739 = vmatprep.subr.bf16.mxu0 0
    %740 = vmatpush1.bf16.msra.mxu0 0
    %741 = vmatprep.subr.bf16.mxu0 0
    %742 = vmatpush1.bf16.msra.mxu0 0
    %743 = vmatprep.mubr.bf16.mxu0 0
    %744 = vmatmul.mubr.bf16.gmra.mrb[0].mxu0 %v639
    %v745 = vpop.f32.mrb[0].mxu0
    %v746 = vadd.f32 %v661, %v745
    %v747 = vpop.f32.mrb[0].mxu0
    %v748 = vpop.f32.mrb[0].mxu0
    %v749 = vadd.f32 %v661, %v748
    %v750 = vpop.f32.mrb[0].mxu0
    %751 = vdwg.mxu0
    %vm752 = vcmask 89088
    %753 = vst.msk [vmem:[#allocation14] sm:$0xff] %vm752, %v746
    %754 = vst.msk [vmem:[#allocation14 + $0x8] sm:$0xff] %vm752, %v749
    // Predicated region
    $region58: #{out_head_forward.1} parent=1 // pred_check
      _
    $region59: #{out_head_forward.1} parent=1 // pred_check_branch
      %756 = sbr.rel (0) target = $region61
    $region60: #{out_head_forward.1} parent=1 // pred_region
      %s758 = ssub.s32 256, 256
      %759 = vsyncadd [#allocation4], %s758
      %s760 = sshll.u32 [#allocation14], 4
      %s761 = int_to_ptr.vmem [resolvable:$true] %s760
      %766 = dma.vmem_to_hbm [thread:$0]  %s761, 256, %s7, [#allocation4], 128, 128, 8
    $region61: #{out_head_forward.1} parent=1 // pred_fallthru
      _
    // Predicated region
    $region62: #{out_head_forward.1} parent=1 // pred_check
      _
    $region63: #{out_head_forward.1} parent=1 // pred_check_branch
      %768 = sbr.rel (0) target = $region65
    $region64: #{out_head_forward.1} parent=1 // pred_region
      %769 = dma.done [#allocation4], 256
    $region65: #{out_head_forward.1} parent=1 // pred_fallthru
      _
    %770 = vsyncpa [#allocation3], 1
    %771 = vsyncpa [#allocation6], 1
    %772 = vsyncpa [#allocation9], 1
    %773 = vsyncpa [#allocation12], 1
    %774 = vsyncpa [#allocation4], 1

</llo_original>
